<compile_context>
chip_gen: v5e
topology: v5e:2x2
jax: 0.10.0
libtpu: 0.0.40
codegen_flags: <defaults>
</compile_context>

<pallas_src>
import jax
import jax.numpy as jnp
from jax.experimental import pallas as pl
from jax.experimental.pallas import tpu as pltpu

IN_DIM = 4
HIDDEN = 128
OUT_DIM = 2
LANE = 128       # f32 lane width
MAX_TB = 512     # max batch tile (keeps the (128, TB) f32 hidden tile VMEM-friendly)


def policy_kernel(x_ref, w1_ref, b1_ref, w2_ref, b2_ref, o_ref):
    # x_ref: (4, TB) batch-transposed states; o_ref: (2, TB) batch-transposed probs.
    x_t = x_ref[...]            # (4, TB)
    w1 = w1_ref[...]            # (128, 4)  torch layout (out, in)

    # fc1 on the VPU: K=4 broadcast-FMAs over a (128, TB) tile.
    h = (b1_ref[...]                       # (128, 1) broadcasts over lanes
         + w1[:, 0:1] * x_t[0:1, :]
         + w1[:, 1:2] * x_t[1:2, :]
         + w1[:, 2:3] * x_t[2:3, :]
         + w1[:, 3:4] * x_t[3:4, :])       # (128, TB)
    h = jnp.maximum(h, 0.0)                # ReLU

    # TODO(synk): nn.Dropout(p=0.6) is identity in eval mode; a training-mode kernel
    # would draw the mask here via pltpu.prng_seed + pltpu.prng_random_bits.

    # fc2 on the MXU: (2, 128) @ (128, TB) -> (2, TB), f32 accumulation.
    logits = (jnp.dot(w2_ref[...], h, preferred_element_type=jnp.float32)
              + b2_ref[...])               # (2, TB)

    # 2-class softmax == sigmoid of the logit difference (no cross-lane reduces;
    # exp goes to the EUP).
    d = logits[1:2, :] - logits[0:1, :]    # (1, TB)
    p1 = 1.0 / (1.0 + jnp.exp(-d))
    p0 = 1.0 - p1
    o_ref[...] = jnp.concatenate([p0, p1], axis=0)   # (2, TB), lane-dense store


@jax.jit
def policy_forward(x, w1, b1, w2, b2):
    """Action probabilities for a batch of CartPole states.

    x: (B, 4); w1: (128, 4); b1: (128,); w2: (2, 128); b2: (2,)   (torch layouts)
    Returns: (B, 2) softmax probabilities.
    """
    B = x.shape[0]
    # Batch tile: multiple of 128, capped at MAX_TB; single tile for small batches.
    b_rounded = ((B + LANE - 1) // LANE) * LANE
    TB = min(MAX_TB, b_rounded)
    n_tiles = (B + TB - 1) // TB
    Bp = n_tiles * TB

    # Pad the batch to Bp (lane aligned) and make batch the lane axis.
    x_pad = jnp.zeros((Bp, IN_DIM), jnp.float32).at[:B, :].set(x.astype(jnp.float32))
    x_t = x_pad.T                                     # (4, Bp)
    b1c = b1.reshape(HIDDEN, 1).astype(jnp.float32)   # (128, 1)
    b2c = b2.reshape(OUT_DIM, 1).astype(jnp.float32)  # (2, 1)

    vmem = pltpu.MemorySpace.VMEM
    # Weights/biases: constant index_map -> DMA'd once, VMEM-resident across all tiles.
    resident = lambda a: pl.BlockSpec(a.shape, lambda i: (0,) * a.ndim, memory_space=vmem)

    probs_t = pl.pallas_call(
        policy_kernel,
        out_shape=jax.ShapeDtypeStruct((OUT_DIM, Bp), jnp.float32),
        grid=(n_tiles,),
        in_specs=[
            pl.BlockSpec((IN_DIM, TB), lambda i: (0, i), memory_space=vmem),  # x tile
            resident(w1),
            resident(b1c),
            resident(w2),
            resident(b2c),
        ],
        out_specs=pl.BlockSpec((OUT_DIM, TB), lambda i: (0, i), memory_space=vmem),
        compiler_params=pltpu.CompilerParams(
            dimension_semantics=("parallel",)),  # v7x: batch tiles across both TCs
    )(x_t, w1.astype(jnp.float32), b1c, w2.astype(jnp.float32), b2c)

    return probs_t.T[:B, :]                           # back to (B, 2), drop padding


def init_params(key):
    # torch nn.Linear default init: U(-1/sqrt(fan_in), +1/sqrt(fan_in)), weight (out, in).
    k1, k2, k3, k4 = jax.random.split(key, 4)
    bound1 = 1.0 / jnp.sqrt(float(IN_DIM))
    bound2 = 1.0 / jnp.sqrt(float(HIDDEN))
    w1 = jax.random.uniform(k1, (HIDDEN, IN_DIM), jnp.float32, -bound1, bound1)
    b1 = jax.random.uniform(k2, (HIDDEN,), jnp.float32, -bound1, bound1)
    w2 = jax.random.uniform(k3, (OUT_DIM, HIDDEN), jnp.float32, -bound2, bound2)
    b2 = jax.random.uniform(k4, (OUT_DIM,), jnp.float32, -bound2, bound2)
    return w1, b1, w2, b2


def _reference(x, w1, b1, w2, b2):
    # Pure-JAX reference (eval-mode dropout = identity), full-precision matmuls.
    hi = jax.lax.Precision.HIGHEST
    h = jnp.maximum(jnp.dot(x, w1.T, precision=hi) + b1, 0.0)
    return jax.nn.softmax(jnp.dot(h, w2.T, precision=hi) + b2, axis=1)


if __name__ == "__main__":
    key = jax.random.PRNGKey(0)
    k_x1, k_x2, k_p = jax.random.split(key, 3)
    w1, b1, w2, b2 = init_params(k_p)

    # Case 1: ragged small batch (single 256-wide tile, exercises padding).
    # Case 2: larger ragged batch (two 512-wide tiles, exercises the grid path).
    for kx, B in ((k_x1, 200), (k_x2, 640)):
        x = jax.random.normal(kx, (B, IN_DIM), jnp.float32)
        out = policy_forward(x, w1, b1, w2, b2)
        jax.block_until_ready(out)

        ref = _reference(x, w1, b1, w2, b2)
        assert out.shape == (B, OUT_DIM)
        # Tolerance sized for the MXU's default-precision f32 matmul in fc2.
        assert jnp.allclose(out, ref, atol=2e-3, rtol=2e-3), \
            float(jnp.max(jnp.abs(out - ref)))
        assert jnp.allclose(jnp.sum(out, axis=1), 1.0, atol=1e-5)
        assert bool(jnp.all(out >= 0.0) & jnp.all(out <= 1.0))

    print("KERNEL_OK")
</pallas_src>

<mosaic_0001>
module attributes {stable_mosaic.version = 11 : i64} {
  func.func @policy_kernel(%arg0: i32, %arg1: memref<4x256xf32, #tpu.memory_space<vmem>>, %arg2: memref<128x4xf32, #tpu.memory_space<vmem>>, %arg3: memref<128x1xf32, #tpu.memory_space<vmem>>, %arg4: memref<2x128xf32, #tpu.memory_space<vmem>>, %arg5: memref<2x1xf32, #tpu.memory_space<vmem>>, %arg6: memref<2x256xf32, #tpu.memory_space<vmem>>) attributes {dimension_semantics = [#tpu.dimension_semantics<parallel>], iteration_bounds = array<i64: 1>, scalar_prefetch = 0 : i64, scratch_operands = 0 : i64, tpu.core_type = #tpu.core_type<tc>, window_params = [{transform_indices = @transform_0, window_bounds = array<i64: 4, 256>}, {pipeline_mode = #tpu.pipeline_mode<synchronous>, transform_indices = @transform_1, window_bounds = array<i64: 128, 4>}, {pipeline_mode = #tpu.pipeline_mode<synchronous>, transform_indices = @transform_2, window_bounds = array<i64: 128, 1>}, {pipeline_mode = #tpu.pipeline_mode<synchronous>, transform_indices = @transform_3, window_bounds = array<i64: 2, 128>}, {pipeline_mode = #tpu.pipeline_mode<synchronous>, transform_indices = @transform_4, window_bounds = array<i64: 2, 1>}, {transform_indices = @transform_5, window_bounds = array<i64: 2, 256>}]} {
    %c0 = arith.constant 0 : index
    %c0_0 = arith.constant 0 : index
    %0 = vector.load %arg1[%c0, %c0_0] : memref<4x256xf32, #tpu.memory_space<vmem>>, vector<4x256xf32>
    %c0_1 = arith.constant 0 : index
    %c0_2 = arith.constant 0 : index
    %1 = vector.load %arg2[%c0_1, %c0_2] : memref<128x4xf32, #tpu.memory_space<vmem>>, vector<128x4xf32>
    %c0_3 = arith.constant 0 : index
    %c0_4 = arith.constant 0 : index
    %2 = vector.load %arg3[%c0_3, %c0_4] : memref<128x1xf32, #tpu.memory_space<vmem>>, vector<128x1xf32>
    %3 = vector.extract_strided_slice %1 {offsets = [0, 0], sizes = [128, 1], strides = [1, 1]} : vector<128x4xf32> to vector<128x1xf32>
    %4 = vector.extract_strided_slice %0 {offsets = [0, 0], sizes = [1, 256], strides = [1, 1]} : vector<4x256xf32> to vector<1x256xf32>
    %5 = vector.broadcast %3 : vector<128x1xf32> to vector<128x256xf32>
    %6 = vector.broadcast %4 : vector<1x256xf32> to vector<128x256xf32>
    %7 = arith.mulf %5, %6 : vector<128x256xf32>
    %8 = vector.broadcast %2 : vector<128x1xf32> to vector<128x256xf32>
    %9 = arith.addf %8, %7 : vector<128x256xf32>
    %10 = vector.extract_strided_slice %1 {offsets = [0, 1], sizes = [128, 1], strides = [1, 1]} : vector<128x4xf32> to vector<128x1xf32>
    %11 = vector.extract_strided_slice %0 {offsets = [1, 0], sizes = [1, 256], strides = [1, 1]} : vector<4x256xf32> to vector<1x256xf32>
    %12 = vector.broadcast %10 : vector<128x1xf32> to vector<128x256xf32>
    %13 = vector.broadcast %11 : vector<1x256xf32> to vector<128x256xf32>
    %14 = arith.mulf %12, %13 : vector<128x256xf32>
    %15 = arith.addf %9, %14 : vector<128x256xf32>
    %16 = vector.extract_strided_slice %1 {offsets = [0, 2], sizes = [128, 1], strides = [1, 1]} : vector<128x4xf32> to vector<128x1xf32>
    %17 = vector.extract_strided_slice %0 {offsets = [2, 0], sizes = [1, 256], strides = [1, 1]} : vector<4x256xf32> to vector<1x256xf32>
    %18 = vector.broadcast %16 : vector<128x1xf32> to vector<128x256xf32>
    %19 = vector.broadcast %17 : vector<1x256xf32> to vector<128x256xf32>
    %20 = arith.mulf %18, %19 : vector<128x256xf32>
    %21 = arith.addf %15, %20 : vector<128x256xf32>
    %22 = vector.extract_strided_slice %1 {offsets = [0, 3], sizes = [128, 1], strides = [1, 1]} : vector<128x4xf32> to vector<128x1xf32>
    %23 = vector.extract_strided_slice %0 {offsets = [3, 0], sizes = [1, 256], strides = [1, 1]} : vector<4x256xf32> to vector<1x256xf32>
    %24 = vector.broadcast %22 : vector<128x1xf32> to vector<128x256xf32>
    %25 = vector.broadcast %23 : vector<1x256xf32> to vector<128x256xf32>
    %26 = arith.mulf %24, %25 : vector<128x256xf32>
    %27 = arith.addf %21, %26 : vector<128x256xf32>
    %cst = arith.constant 0.000000e+00 : f32
    %28 = vector.broadcast %cst : f32 to vector<128x256xf32>
    %29 = arith.maximumf %27, %28 : vector<128x256xf32>
    %c0_5 = arith.constant 0 : index
    %c0_6 = arith.constant 0 : index
    %30 = vector.load %arg4[%c0_5, %c0_6] : memref<2x128xf32, #tpu.memory_space<vmem>>, vector<2x128xf32>
    %cst_7 = arith.constant dense<0.000000e+00> : vector<2x256xf32>
    %31 = tpu.matmul %30, %29, %cst_7 {dimension_numbers = #tpu.dot_dimension_numbers<[1], [0], [0], [1], [0, 0, 1, 1], [], []>} : vector<2x128xf32>, vector<128x256xf32>, vector<2x256xf32> -> vector<2x256xf32>
    %c0_8 = arith.constant 0 : index
    %c0_9 = arith.constant 0 : index
    %32 = vector.load %arg5[%c0_8, %c0_9] : memref<2x1xf32, #tpu.memory_space<vmem>>, vector<2x1xf32>
    %33 = vector.broadcast %32 : vector<2x1xf32> to vector<2x256xf32>
    %34 = arith.addf %31, %33 : vector<2x256xf32>
    %35 = vector.extract_strided_slice %34 {offsets = [1, 0], sizes = [1, 256], strides = [1, 1]} : vector<2x256xf32> to vector<1x256xf32>
    %36 = vector.extract_strided_slice %34 {offsets = [0, 0], sizes = [1, 256], strides = [1, 1]} : vector<2x256xf32> to vector<1x256xf32>
    %37 = arith.subf %35, %36 : vector<1x256xf32>
    %cst_10 = arith.constant 0.000000e+00 : f32
    %38 = vector.broadcast %cst_10 : f32 to vector<1x256xf32>
    %39 = arith.subf %38, %37 : vector<1x256xf32>
    %40 = math.exp %39 : vector<1x256xf32>
    %cst_11 = arith.constant 1.000000e+00 : f32
    %41 = vector.broadcast %cst_11 : f32 to vector<1x256xf32>
    %42 = arith.addf %41, %40 : vector<1x256xf32>
    %cst_12 = arith.constant 1.000000e+00 : f32
    %43 = vector.broadcast %cst_12 : f32 to vector<1x256xf32>
    %44 = arith.divf %43, %42 : vector<1x256xf32>
    %cst_13 = arith.constant 1.000000e+00 : f32
    %45 = vector.broadcast %cst_13 : f32 to vector<1x256xf32>
    %46 = arith.subf %45, %44 : vector<1x256xf32>
    %47 = tpu.concatenate %46, %44 in 0 : vector<1x256xf32>, vector<1x256xf32> -> vector<2x256xf32>
    %c0_14 = arith.constant 0 : index
    %c0_15 = arith.constant 0 : index
    %48 = vector.load %arg6[%c0_14, %c0_15] : memref<2x256xf32, #tpu.memory_space<vmem>>, vector<2x256xf32>
    tpu.vector_store %arg6[%c0_14, %c0_15], %47 {strides = array<i32>} : memref<2x256xf32, #tpu.memory_space<vmem>>, vector<2x256xf32>,
    return
  }
  func.func @transform_0(%arg0: i32) -> (i32, i32) {
    %c0_i32 = arith.constant 0 : i32
    %c0_i32_0 = arith.constant 0 : i32
    return %c0_i32, %arg0 : i32, i32
  }
  func.func @transform_1(%arg0: i32) -> (i32, i32) {
    %c0_i32 = arith.constant 0 : i32
    %c0_i32_0 = arith.constant 0 : i32
    %c0_i32_1 = arith.constant 0 : i32
    return %c0_i32, %c0_i32_0 : i32, i32
  }
  func.func @transform_2(%arg0: i32) -> (i32, i32) {
    %c0_i32 = arith.constant 0 : i32
    %c0_i32_0 = arith.constant 0 : i32
    %c0_i32_1 = arith.constant 0 : i32
    return %c0_i32, %c0_i32_0 : i32, i32
  }
  func.func @transform_3(%arg0: i32) -> (i32, i32) {
    %c0_i32 = arith.constant 0 : i32
    %c0_i32_0 = arith.constant 0 : i32
    %c0_i32_1 = arith.constant 0 : i32
    return %c0_i32, %c0_i32_0 : i32, i32
  }
  func.func @transform_4(%arg0: i32) -> (i32, i32) {
    %c0_i32 = arith.constant 0 : i32
    %c0_i32_0 = arith.constant 0 : i32
    %c0_i32_1 = arith.constant 0 : i32
    return %c0_i32, %c0_i32_0 : i32, i32
  }
  func.func @transform_5(%arg0: i32) -> (i32, i32) {
    %c0_i32 = arith.constant 0 : i32
    %c0_i32_0 = arith.constant 0 : i32
    return %c0_i32, %arg0 : i32, i32
  }
}

</mosaic_0001>

<llo_original>
// kernel: policy_forward.1
$region0: #{policy_forward.1}
  #allocation0 [shape = 'u32[]', space=smem, size = 0x4, offset = 0x4, fixed_abs, tag = 'smem constant byte address 0x4 - core index']
  #allocation1 [shape = 'u32[72,128]{1,0:T(1,128)}', space=vmem, size = 0x9000, scoped, tag = 'internal scratch']
  %s0 = inlined_call_operand.vmem [shape: f32[4,256], index: 0, kind: input, shape index: {}]
  %s1 = inlined_call_operand.vmem [shape: f32[128,4], index: 1, kind: input, shape index: {}]
  %s2 = inlined_call_operand.vmem [shape: f32[128,1], index: 2, kind: input, shape index: {}]
  %s3 = inlined_call_operand.vmem [shape: f32[2,128], index: 3, kind: input, shape index: {}]
  %s4 = inlined_call_operand.vmem [shape: f32[2,1], index: 4, kind: input, shape index: {}]
  %s5 = inlined_call_operand.hbm [shape: f32[2,256], index: 5, kind: output, shape index: {}]
  %s6 = sld [smem:[#allocation0]]
  $region30: #{policy_forward.1} parent=0
    _
  %s8 = ssub.s32 1, %s6
  %s9 = scalar_select 0, %s8, %s6
  $region1: #{policy_forward.1} parent=0
    #allocation2 [shape = 'u8[2048]{0}', space=vmem, size = 0x800, scoped, tag = 'output window, operand 0, single buffered']
    #allocation3 [shape = 's32[1]{0}', space=sflag, size = 0x4, scoped, tag = 'scoped memory for policy_forward.1']
    %10 = vsyncpa [#allocation3], 0
    // Predicated region
    $region2: #{policy_forward.1} parent=1 // pred_check
      _
    $region3: #{policy_forward.1} parent=1 // pred_check_branch
      %12 = sbr.rel (0) target = $region5
    $region4: #{policy_forward.1} parent=1 // pred_region
      _
    $region5: #{policy_forward.1} parent=1 // pred_fallthru
      _
    // Predicated region
    $region6: #{policy_forward.1} parent=1 // pred_check
      _
    $region7: #{policy_forward.1} parent=1 // pred_check_branch
      %14 = sbr.rel (0) target = $region9
    $region8: #{policy_forward.1} parent=1 // pred_region
      _
    $region9: #{policy_forward.1} parent=1 // pred_fallthru
      _
    // Predicated region
    $region10: #{policy_forward.1} parent=1 // pred_check
      _
    $region11: #{policy_forward.1} parent=1 // pred_check_branch
      %16 = sbr.rel (0) target = $region13
    $region12: #{policy_forward.1} parent=1 // pred_region
      _
    $region13: #{policy_forward.1} parent=1 // pred_fallthru
      _
    // Predicated region
    $region14: #{policy_forward.1} parent=1 // pred_check
      _
    $region15: #{policy_forward.1} parent=1 // pred_check_branch
      %18 = sbr.rel (0) target = $region17
    $region16: #{policy_forward.1} parent=1 // pred_region
      _
    $region17: #{policy_forward.1} parent=1 // pred_fallthru
      _
    // Predicated region
    $region18: #{policy_forward.1} parent=1 // pred_check
      _
    $region19: #{policy_forward.1} parent=1 // pred_check_branch
      %20 = sbr.rel (0) target = $region21
    $region20: #{policy_forward.1} parent=1 // pred_region
      _
    $region21: #{policy_forward.1} parent=1 // pred_fallthru
      _
    %v21 = vld [vmem:[%s0] sm:$0xff]
    %v22 = vld [vmem:[%s1] sm:$0xff]
    %v23 = vld [vmem:[%s1 + $0x8] sm:$0xff]
    %v24 = vld [vmem:[%s1 + $0x10] sm:$0xff]
    %v25 = vld [vmem:[%s1 + $0x18] sm:$0xff]
    %v26 = vld [vmem:[%s1 + $0x20] sm:$0xff]
    %v27 = vld [vmem:[%s1 + $0x28] sm:$0xff]
    %v28 = vld [vmem:[%s1 + $0x30] sm:$0xff]
    %v29 = vld [vmem:[%s1 + $0x38] sm:$0xff]
    %v30 = vld [vmem:[%s1 + $0x40] sm:$0xff]
    %v31 = vld [vmem:[%s1 + $0x48] sm:$0xff]
    %v32 = vld [vmem:[%s1 + $0x50] sm:$0xff]
    %v33 = vld [vmem:[%s1 + $0x58] sm:$0xff]
    %v34 = vld [vmem:[%s1 + $0x60] sm:$0xff]
    %v35 = vld [vmem:[%s1 + $0x68] sm:$0xff]
    %v36 = vld [vmem:[%s1 + $0x70] sm:$0xff]
    %v37 = vld [vmem:[%s1 + $0x78] sm:$0xff]
    %v38 = vld [vmem:[%s2] sm:$0xff]
    %v39 = vld [vmem:[%s2 + $0x8] sm:$0xff]
    %v40 = vld [vmem:[%s2 + $0x10] sm:$0xff]
    %v41 = vld [vmem:[%s2 + $0x18] sm:$0xff]
    %v42 = vld [vmem:[%s2 + $0x20] sm:$0xff]
    %v43 = vld [vmem:[%s2 + $0x28] sm:$0xff]
    %v44 = vld [vmem:[%s2 + $0x30] sm:$0xff]
    %v45 = vld [vmem:[%s2 + $0x38] sm:$0xff]
    %v46 = vld [vmem:[%s2 + $0x40] sm:$0xff]
    %v47 = vld [vmem:[%s2 + $0x48] sm:$0xff]
    %v48 = vld [vmem:[%s2 + $0x50] sm:$0xff]
    %v49 = vld [vmem:[%s2 + $0x58] sm:$0xff]
    %v50 = vld [vmem:[%s2 + $0x60] sm:$0xff]
    %v51 = vld [vmem:[%s2 + $0x68] sm:$0xff]
    %v52 = vld [vmem:[%s2 + $0x70] sm:$0xff]
    %v53 = vld [vmem:[%s2 + $0x78] sm:$0xff]
    %55 = vset.pattern.permute.xlu0 0
    %56 = vperm.xlu0 %55, %v22
    %v57 = vpop.permute.xlu0 %56
    %60 = vset.pattern.permute.xlu0 0
    %61 = vperm.xlu0 %60, %v23
    %v62 = vpop.permute.xlu0 %61
    %65 = vset.pattern.permute.xlu0 0
    %66 = vperm.xlu0 %65, %v24
    %v67 = vpop.permute.xlu0 %66
    %70 = vset.pattern.permute.xlu0 0
    %71 = vperm.xlu0 %70, %v25
    %v72 = vpop.permute.xlu0 %71
    %75 = vset.pattern.permute.xlu0 0
    %76 = vperm.xlu0 %75, %v26
    %v77 = vpop.permute.xlu0 %76
    %80 = vset.pattern.permute.xlu0 0
    %81 = vperm.xlu0 %80, %v27
    %v82 = vpop.permute.xlu0 %81
    %85 = vset.pattern.permute.xlu0 0
    %86 = vperm.xlu0 %85, %v28
    %v87 = vpop.permute.xlu0 %86
    %90 = vset.pattern.permute.xlu0 0
    %91 = vperm.xlu0 %90, %v29
    %v92 = vpop.permute.xlu0 %91
    %95 = vset.pattern.permute.xlu0 0
    %96 = vperm.xlu0 %95, %v30
    %v97 = vpop.permute.xlu0 %96
    %100 = vset.pattern.permute.xlu0 0
    %101 = vperm.xlu0 %100, %v31
    %v102 = vpop.permute.xlu0 %101
    %105 = vset.pattern.permute.xlu0 0
    %106 = vperm.xlu0 %105, %v32
    %v107 = vpop.permute.xlu0 %106
    %110 = vset.pattern.permute.xlu0 0
    %111 = vperm.xlu0 %110, %v33
    %v112 = vpop.permute.xlu0 %111
    %115 = vset.pattern.permute.xlu0 0
    %116 = vperm.xlu0 %115, %v34
    %v117 = vpop.permute.xlu0 %116
    %120 = vset.pattern.permute.xlu0 0
    %121 = vperm.xlu0 %120, %v35
    %v122 = vpop.permute.xlu0 %121
    %125 = vset.pattern.permute.xlu0 0
    %126 = vperm.xlu0 %125, %v36
    %v127 = vpop.permute.xlu0 %126
    %130 = vset.pattern.permute.xlu0 0
    %131 = vperm.xlu0 %130, %v37
    %v132 = vpop.permute.xlu0 %131
    %v135 = vperm.slane %v21, 0
    %v136 = vperm.slane %v21, 4
    %v139 = vperm.slane %v135, 0
    %v140 = vperm.slane %v136, 0
    %v141 = vmul.f32 %v57, %v139
    %v142 = vmul.f32 %v57, %v140
    %v143 = vmul.f32 %v62, %v139
    %v144 = vmul.f32 %v62, %v140
    %v145 = vmul.f32 %v67, %v139
    %v146 = vmul.f32 %v67, %v140
    %v147 = vmul.f32 %v72, %v139
    %v148 = vmul.f32 %v72, %v140
    %v149 = vmul.f32 %v77, %v139
    %v150 = vmul.f32 %v77, %v140
    %v151 = vmul.f32 %v82, %v139
    %v152 = vmul.f32 %v82, %v140
    %v153 = vmul.f32 %v87, %v139
    %v154 = vmul.f32 %v87, %v140
    %v155 = vmul.f32 %v92, %v139
    %v156 = vmul.f32 %v92, %v140
    %v157 = vmul.f32 %v97, %v139
    %v158 = vmul.f32 %v97, %v140
    %v159 = vmul.f32 %v102, %v139
    %v160 = vmul.f32 %v102, %v140
    %v161 = vmul.f32 %v107, %v139
    %v162 = vmul.f32 %v107, %v140
    %v163 = vmul.f32 %v112, %v139
    %v164 = vmul.f32 %v112, %v140
    %v165 = vmul.f32 %v117, %v139
    %v166 = vmul.f32 %v117, %v140
    %v167 = vmul.f32 %v122, %v139
    %v168 = vmul.f32 %v122, %v140
    %v169 = vmul.f32 %v127, %v139
    %v170 = vmul.f32 %v127, %v140
    %v171 = vmul.f32 %v132, %v139
    %v172 = vmul.f32 %v132, %v140
    %174 = vset.pattern.permute.xlu0 0
    %175 = vperm.xlu0 %174, %v38
    %v176 = vpop.permute.xlu0 %175
    %179 = vset.pattern.permute.xlu0 0
    %180 = vperm.xlu0 %179, %v39
    %v181 = vpop.permute.xlu0 %180
    %184 = vset.pattern.permute.xlu0 0
    %185 = vperm.xlu0 %184, %v40
    %v186 = vpop.permute.xlu0 %185
    %189 = vset.pattern.permute.xlu0 0
    %190 = vperm.xlu0 %189, %v41
    %v191 = vpop.permute.xlu0 %190
    %194 = vset.pattern.permute.xlu0 0
    %195 = vperm.xlu0 %194, %v42
    %v196 = vpop.permute.xlu0 %195
    %199 = vset.pattern.permute.xlu0 0
    %200 = vperm.xlu0 %199, %v43
    %v201 = vpop.permute.xlu0 %200
    %204 = vset.pattern.permute.xlu0 0
    %205 = vperm.xlu0 %204, %v44
    %v206 = vpop.permute.xlu0 %205
    %209 = vset.pattern.permute.xlu0 0
    %210 = vperm.xlu0 %209, %v45
    %v211 = vpop.permute.xlu0 %210
    %214 = vset.pattern.permute.xlu0 0
    %215 = vperm.xlu0 %214, %v46
    %v216 = vpop.permute.xlu0 %215
    %219 = vset.pattern.permute.xlu0 0
    %220 = vperm.xlu0 %219, %v47
    %v221 = vpop.permute.xlu0 %220
    %224 = vset.pattern.permute.xlu0 0
    %225 = vperm.xlu0 %224, %v48
    %v226 = vpop.permute.xlu0 %225
    %229 = vset.pattern.permute.xlu0 0
    %230 = vperm.xlu0 %229, %v49
    %v231 = vpop.permute.xlu0 %230
    %234 = vset.pattern.permute.xlu0 0
    %235 = vperm.xlu0 %234, %v50
    %v236 = vpop.permute.xlu0 %235
    %239 = vset.pattern.permute.xlu0 0
    %240 = vperm.xlu0 %239, %v51
    %v241 = vpop.permute.xlu0 %240
    %244 = vset.pattern.permute.xlu0 0
    %245 = vperm.xlu0 %244, %v52
    %v246 = vpop.permute.xlu0 %245
    %249 = vset.pattern.permute.xlu0 0
    %250 = vperm.xlu0 %249, %v53
    %v251 = vpop.permute.xlu0 %250
    %v253 = vadd.f32 %v176, %v141
    %v254 = vadd.f32 %v176, %v142
    %v255 = vadd.f32 %v181, %v143
    %v256 = vadd.f32 %v181, %v144
    %v257 = vadd.f32 %v186, %v145
    %v258 = vadd.f32 %v186, %v146
    %v259 = vadd.f32 %v191, %v147
    %v260 = vadd.f32 %v191, %v148
    %v261 = vadd.f32 %v196, %v149
    %v262 = vadd.f32 %v196, %v150
    %v263 = vadd.f32 %v201, %v151
    %v264 = vadd.f32 %v201, %v152
    %v265 = vadd.f32 %v206, %v153
    %v266 = vadd.f32 %v206, %v154
    %v267 = vadd.f32 %v211, %v155
    %v268 = vadd.f32 %v211, %v156
    %v269 = vadd.f32 %v216, %v157
    %v270 = vadd.f32 %v216, %v158
    %v271 = vadd.f32 %v221, %v159
    %v272 = vadd.f32 %v221, %v160
    %v273 = vadd.f32 %v226, %v161
    %v274 = vadd.f32 %v226, %v162
    %v275 = vadd.f32 %v231, %v163
    %v276 = vadd.f32 %v231, %v164
    %v277 = vadd.f32 %v236, %v165
    %v278 = vadd.f32 %v236, %v166
    %v279 = vadd.f32 %v241, %v167
    %v280 = vadd.f32 %v241, %v168
    %v281 = vadd.f32 %v246, %v169
    %v282 = vadd.f32 %v246, %v170
    %v283 = vadd.f32 %v251, %v171
    %v284 = vadd.f32 %v251, %v172
    %285 = vset.pattern.permute.xlu0 1
    %286 = vperm.xlu0 %285, %v22
    %v287 = vpop.permute.xlu0 %286
    %289 = vset.pattern.permute.xlu0 1
    %290 = vperm.xlu0 %289, %v23
    %v291 = vpop.permute.xlu0 %290
    %293 = vset.pattern.permute.xlu0 1
    %294 = vperm.xlu0 %293, %v24
    %v295 = vpop.permute.xlu0 %294
    %297 = vset.pattern.permute.xlu0 1
    %298 = vperm.xlu0 %297, %v25
    %v299 = vpop.permute.xlu0 %298
    %301 = vset.pattern.permute.xlu0 1
    %302 = vperm.xlu0 %301, %v26
    %v303 = vpop.permute.xlu0 %302
    %305 = vset.pattern.permute.xlu0 1
    %306 = vperm.xlu0 %305, %v27
    %v307 = vpop.permute.xlu0 %306
    %309 = vset.pattern.permute.xlu0 1
    %310 = vperm.xlu0 %309, %v28
    %v311 = vpop.permute.xlu0 %310
    %313 = vset.pattern.permute.xlu0 1
    %314 = vperm.xlu0 %313, %v29
    %v315 = vpop.permute.xlu0 %314
    %317 = vset.pattern.permute.xlu0 1
    %318 = vperm.xlu0 %317, %v30
    %v319 = vpop.permute.xlu0 %318
    %321 = vset.pattern.permute.xlu0 1
    %322 = vperm.xlu0 %321, %v31
    %v323 = vpop.permute.xlu0 %322
    %325 = vset.pattern.permute.xlu0 1
    %326 = vperm.xlu0 %325, %v32
    %v327 = vpop.permute.xlu0 %326
    %329 = vset.pattern.permute.xlu0 1
    %330 = vperm.xlu0 %329, %v33
    %v331 = vpop.permute.xlu0 %330
    %333 = vset.pattern.permute.xlu0 1
    %334 = vperm.xlu0 %333, %v34
    %v335 = vpop.permute.xlu0 %334
    %337 = vset.pattern.permute.xlu0 1
    %338 = vperm.xlu0 %337, %v35
    %v339 = vpop.permute.xlu0 %338
    %341 = vset.pattern.permute.xlu0 1
    %342 = vperm.xlu0 %341, %v36
    %v343 = vpop.permute.xlu0 %342
    %345 = vset.pattern.permute.xlu0 1
    %346 = vperm.xlu0 %345, %v37
    %v347 = vpop.permute.xlu0 %346
    %v349 = vperm.slane %v21, 1
    %v350 = vperm.slane %v21, 5
    %v353 = vperm.slane %v349, 1
    %v354 = vperm.slane %v350, 1
    %v355 = vmul.f32 %v287, %v353
    %v356 = vmul.f32 %v287, %v354
    %v357 = vmul.f32 %v291, %v353
    %v358 = vmul.f32 %v291, %v354
    %v359 = vmul.f32 %v295, %v353
    %v360 = vmul.f32 %v295, %v354
    %v361 = vmul.f32 %v299, %v353
    %v362 = vmul.f32 %v299, %v354
    %v363 = vmul.f32 %v303, %v353
    %v364 = vmul.f32 %v303, %v354
    %v365 = vmul.f32 %v307, %v353
    %v366 = vmul.f32 %v307, %v354
    %v367 = vmul.f32 %v311, %v353
    %v368 = vmul.f32 %v311, %v354
    %v369 = vmul.f32 %v315, %v353
    %v370 = vmul.f32 %v315, %v354
    %v371 = vmul.f32 %v319, %v353
    %v372 = vmul.f32 %v319, %v354
    %v373 = vmul.f32 %v323, %v353
    %v374 = vmul.f32 %v323, %v354
    %v375 = vmul.f32 %v327, %v353
    %v376 = vmul.f32 %v327, %v354
    %v377 = vmul.f32 %v331, %v353
    %v378 = vmul.f32 %v331, %v354
    %v379 = vmul.f32 %v335, %v353
    %v380 = vmul.f32 %v335, %v354
    %v381 = vmul.f32 %v339, %v353
    %v382 = vmul.f32 %v339, %v354
    %v383 = vmul.f32 %v343, %v353
    %v384 = vmul.f32 %v343, %v354
    %v385 = vmul.f32 %v347, %v353
    %v386 = vmul.f32 %v347, %v354
    %v387 = vadd.f32 %v253, %v355
    %v388 = vadd.f32 %v254, %v356
    %v389 = vadd.f32 %v255, %v357
    %v390 = vadd.f32 %v256, %v358
    %v391 = vadd.f32 %v257, %v359
    %v392 = vadd.f32 %v258, %v360
    %v393 = vadd.f32 %v259, %v361
    %v394 = vadd.f32 %v260, %v362
    %v395 = vadd.f32 %v261, %v363
    %v396 = vadd.f32 %v262, %v364
    %v397 = vadd.f32 %v263, %v365
    %v398 = vadd.f32 %v264, %v366
    %v399 = vadd.f32 %v265, %v367
    %v400 = vadd.f32 %v266, %v368
    %v401 = vadd.f32 %v267, %v369
    %v402 = vadd.f32 %v268, %v370
    %v403 = vadd.f32 %v269, %v371
    %v404 = vadd.f32 %v270, %v372
    %v405 = vadd.f32 %v271, %v373
    %v406 = vadd.f32 %v272, %v374
    %v407 = vadd.f32 %v273, %v375
    %v408 = vadd.f32 %v274, %v376
    %v409 = vadd.f32 %v275, %v377
    %v410 = vadd.f32 %v276, %v378
    %v411 = vadd.f32 %v277, %v379
    %v412 = vadd.f32 %v278, %v380
    %v413 = vadd.f32 %v279, %v381
    %v414 = vadd.f32 %v280, %v382
    %v415 = vadd.f32 %v281, %v383
    %v416 = vadd.f32 %v282, %v384
    %v417 = vadd.f32 %v283, %v385
    %v418 = vadd.f32 %v284, %v386
    %419 = vset.pattern.permute.xlu0 2
    %420 = vperm.xlu0 %419, %v22
    %v421 = vpop.permute.xlu0 %420
    %423 = vset.pattern.permute.xlu0 2
    %424 = vperm.xlu0 %423, %v23
    %v425 = vpop.permute.xlu0 %424
    %427 = vset.pattern.permute.xlu0 2
    %428 = vperm.xlu0 %427, %v24
    %v429 = vpop.permute.xlu0 %428
    %431 = vset.pattern.permute.xlu0 2
    %432 = vperm.xlu0 %431, %v25
    %v433 = vpop.permute.xlu0 %432
    %435 = vset.pattern.permute.xlu0 2
    %436 = vperm.xlu0 %435, %v26
    %v437 = vpop.permute.xlu0 %436
    %439 = vset.pattern.permute.xlu0 2
    %440 = vperm.xlu0 %439, %v27
    %v441 = vpop.permute.xlu0 %440
    %443 = vset.pattern.permute.xlu0 2
    %444 = vperm.xlu0 %443, %v28
    %v445 = vpop.permute.xlu0 %444
    %447 = vset.pattern.permute.xlu0 2
    %448 = vperm.xlu0 %447, %v29
    %v449 = vpop.permute.xlu0 %448
    %451 = vset.pattern.permute.xlu0 2
    %452 = vperm.xlu0 %451, %v30
    %v453 = vpop.permute.xlu0 %452
    %455 = vset.pattern.permute.xlu0 2
    %456 = vperm.xlu0 %455, %v31
    %v457 = vpop.permute.xlu0 %456
    %459 = vset.pattern.permute.xlu0 2
    %460 = vperm.xlu0 %459, %v32
    %v461 = vpop.permute.xlu0 %460
    %463 = vset.pattern.permute.xlu0 2
    %464 = vperm.xlu0 %463, %v33
    %v465 = vpop.permute.xlu0 %464
    %467 = vset.pattern.permute.xlu0 2
    %468 = vperm.xlu0 %467, %v34
    %v469 = vpop.permute.xlu0 %468
    %471 = vset.pattern.permute.xlu0 2
    %472 = vperm.xlu0 %471, %v35
    %v473 = vpop.permute.xlu0 %472
    %475 = vset.pattern.permute.xlu0 2
    %476 = vperm.xlu0 %475, %v36
    %v477 = vpop.permute.xlu0 %476
    %479 = vset.pattern.permute.xlu0 2
    %480 = vperm.xlu0 %479, %v37
    %v481 = vpop.permute.xlu0 %480
    %v483 = vperm.slane %v21, 2
    %v484 = vperm.slane %v21, 6
    %v487 = vperm.slane %v483, 2
    %v488 = vperm.slane %v484, 2
    %v489 = vmul.f32 %v421, %v487
    %v490 = vmul.f32 %v421, %v488
    %v491 = vmul.f32 %v425, %v487
    %v492 = vmul.f32 %v425, %v488
    %v493 = vmul.f32 %v429, %v487
    %v494 = vmul.f32 %v429, %v488
    %v495 = vmul.f32 %v433, %v487
    %v496 = vmul.f32 %v433, %v488
    %v497 = vmul.f32 %v437, %v487
    %v498 = vmul.f32 %v437, %v488
    %v499 = vmul.f32 %v441, %v487
    %v500 = vmul.f32 %v441, %v488
    %v501 = vmul.f32 %v445, %v487
    %v502 = vmul.f32 %v445, %v488
    %v503 = vmul.f32 %v449, %v487
    %v504 = vmul.f32 %v449, %v488
    %v505 = vmul.f32 %v453, %v487
    %v506 = vmul.f32 %v453, %v488
    %v507 = vmul.f32 %v457, %v487
    %v508 = vmul.f32 %v457, %v488
    %v509 = vmul.f32 %v461, %v487
    %v510 = vmul.f32 %v461, %v488
    %v511 = vmul.f32 %v465, %v487
    %v512 = vmul.f32 %v465, %v488
    %v513 = vmul.f32 %v469, %v487
    %v514 = vmul.f32 %v469, %v488
    %v515 = vmul.f32 %v473, %v487
    %v516 = vmul.f32 %v473, %v488
    %v517 = vmul.f32 %v477, %v487
    %v518 = vmul.f32 %v477, %v488
    %v519 = vmul.f32 %v481, %v487
    %v520 = vmul.f32 %v481, %v488
    %v521 = vadd.f32 %v387, %v489
    %v522 = vadd.f32 %v388, %v490
    %v523 = vadd.f32 %v389, %v491
    %v524 = vadd.f32 %v390, %v492
    %v525 = vadd.f32 %v391, %v493
    %v526 = vadd.f32 %v392, %v494
    %v527 = vadd.f32 %v393, %v495
    %v528 = vadd.f32 %v394, %v496
    %v529 = vadd.f32 %v395, %v497
    %v530 = vadd.f32 %v396, %v498
    %v531 = vadd.f32 %v397, %v499
    %v532 = vadd.f32 %v398, %v500
    %v533 = vadd.f32 %v399, %v501
    %v534 = vadd.f32 %v400, %v502
    %v535 = vadd.f32 %v401, %v503
    %v536 = vadd.f32 %v402, %v504
    %v537 = vadd.f32 %v403, %v505
    %v538 = vadd.f32 %v404, %v506
    %v539 = vadd.f32 %v405, %v507
    %v540 = vadd.f32 %v406, %v508
    %v541 = vadd.f32 %v407, %v509
    %v542 = vadd.f32 %v408, %v510
    %v543 = vadd.f32 %v409, %v511
    %v544 = vadd.f32 %v410, %v512
    %v545 = vadd.f32 %v411, %v513
    %v546 = vadd.f32 %v412, %v514
    %v547 = vadd.f32 %v413, %v515
    %v548 = vadd.f32 %v414, %v516
    %v549 = vadd.f32 %v415, %v517
    %v550 = vadd.f32 %v416, %v518
    %v551 = vadd.f32 %v417, %v519
    %v552 = vadd.f32 %v418, %v520
    %553 = vset.pattern.permute.xlu0 3
    %554 = vperm.xlu0 %553, %v22
    %v555 = vpop.permute.xlu0 %554
    %557 = vset.pattern.permute.xlu0 3
    %558 = vperm.xlu0 %557, %v23
    %v559 = vpop.permute.xlu0 %558
    %561 = vset.pattern.permute.xlu0 3
    %562 = vperm.xlu0 %561, %v24
    %v563 = vpop.permute.xlu0 %562
    %565 = vset.pattern.permute.xlu0 3
    %566 = vperm.xlu0 %565, %v25
    %v567 = vpop.permute.xlu0 %566
    %569 = vset.pattern.permute.xlu0 3
    %570 = vperm.xlu0 %569, %v26
    %v571 = vpop.permute.xlu0 %570
    %573 = vset.pattern.permute.xlu0 3
    %574 = vperm.xlu0 %573, %v27
    %v575 = vpop.permute.xlu0 %574
    %577 = vset.pattern.permute.xlu0 3
    %578 = vperm.xlu0 %577, %v28
    %v579 = vpop.permute.xlu0 %578
    %581 = vset.pattern.permute.xlu0 3
    %582 = vperm.xlu0 %581, %v29
    %v583 = vpop.permute.xlu0 %582
    %585 = vset.pattern.permute.xlu0 3
    %586 = vperm.xlu0 %585, %v30
    %v587 = vpop.permute.xlu0 %586
    %589 = vset.pattern.permute.xlu0 3
    %590 = vperm.xlu0 %589, %v31
    %v591 = vpop.permute.xlu0 %590
    %593 = vset.pattern.permute.xlu0 3
    %594 = vperm.xlu0 %593, %v32
    %v595 = vpop.permute.xlu0 %594
    %597 = vset.pattern.permute.xlu0 3
    %598 = vperm.xlu0 %597, %v33
    %v599 = vpop.permute.xlu0 %598
    %601 = vset.pattern.permute.xlu0 3
    %602 = vperm.xlu0 %601, %v34
    %v603 = vpop.permute.xlu0 %602
    %605 = vset.pattern.permute.xlu0 3
    %606 = vperm.xlu0 %605, %v35
    %v607 = vpop.permute.xlu0 %606
    %609 = vset.pattern.permute.xlu0 3
    %610 = vperm.xlu0 %609, %v36
    %v611 = vpop.permute.xlu0 %610
    %613 = vset.pattern.permute.xlu0 3
    %614 = vperm.xlu0 %613, %v37
    %v615 = vpop.permute.xlu0 %614
    %v617 = vperm.slane %v21, 3
    %v618 = vperm.slane %v21, 7
    %v621 = vperm.slane %v617, 3
    %v622 = vperm.slane %v618, 3
    %v623 = vmul.f32 %v555, %v621
    %v624 = vmul.f32 %v555, %v622
    %v625 = vmul.f32 %v559, %v621
    %v626 = vmul.f32 %v559, %v622
    %v627 = vmul.f32 %v563, %v621
    %v628 = vmul.f32 %v563, %v622
    %v629 = vmul.f32 %v567, %v621
    %v630 = vmul.f32 %v567, %v622
    %v631 = vmul.f32 %v571, %v621
    %v632 = vmul.f32 %v571, %v622
    %v633 = vmul.f32 %v575, %v621
    %v634 = vmul.f32 %v575, %v622
    %v635 = vmul.f32 %v579, %v621
    %v636 = vmul.f32 %v579, %v622
    %v637 = vmul.f32 %v583, %v621
    %v638 = vmul.f32 %v583, %v622
    %v639 = vmul.f32 %v587, %v621
    %v640 = vmul.f32 %v587, %v622
    %v641 = vmul.f32 %v591, %v621
    %v642 = vmul.f32 %v591, %v622
    %v643 = vmul.f32 %v595, %v621
    %v644 = vmul.f32 %v595, %v622
    %v645 = vmul.f32 %v599, %v621
    %v646 = vmul.f32 %v599, %v622
    %v647 = vmul.f32 %v603, %v621
    %v648 = vmul.f32 %v603, %v622
    %v649 = vmul.f32 %v607, %v621
    %v650 = vmul.f32 %v607, %v622
    %v651 = vmul.f32 %v611, %v621
    %v652 = vmul.f32 %v611, %v622
    %v653 = vmul.f32 %v615, %v621
    %v654 = vmul.f32 %v615, %v622
    %v655 = vadd.f32 %v521, %v623
    %v656 = vadd.f32 %v522, %v624
    %v657 = vadd.f32 %v523, %v625
    %v658 = vadd.f32 %v524, %v626
    %v659 = vadd.f32 %v525, %v627
    %v660 = vadd.f32 %v526, %v628
    %v661 = vadd.f32 %v527, %v629
    %v662 = vadd.f32 %v528, %v630
    %v663 = vadd.f32 %v529, %v631
    %v664 = vadd.f32 %v530, %v632
    %v665 = vadd.f32 %v531, %v633
    %v666 = vadd.f32 %v532, %v634
    %v667 = vadd.f32 %v533, %v635
    %v668 = vadd.f32 %v534, %v636
    %v669 = vadd.f32 %v535, %v637
    %v670 = vadd.f32 %v536, %v638
    %v671 = vadd.f32 %v537, %v639
    %v672 = vadd.f32 %v538, %v640
    %v673 = vadd.f32 %v539, %v641
    %v674 = vadd.f32 %v540, %v642
    %v675 = vadd.f32 %v541, %v643
    %v676 = vadd.f32 %v542, %v644
    %v677 = vadd.f32 %v543, %v645
    %v678 = vadd.f32 %v544, %v646
    %v679 = vadd.f32 %v545, %v647
    %v680 = vadd.f32 %v546, %v648
    %v681 = vadd.f32 %v547, %v649
    %v682 = vadd.f32 %v548, %v650
    %v683 = vadd.f32 %v549, %v651
    %v684 = vadd.f32 %v550, %v652
    %v685 = vadd.f32 %v551, %v653
    %v686 = vadd.f32 %v552, %v654
    %v687 = vmax.f32 %v655, 0.0
    %v688 = vmax.f32 %v656, 0.0
    %v689 = vmax.f32 %v657, 0.0
    %v690 = vmax.f32 %v658, 0.0
    %v691 = vmax.f32 %v659, 0.0
    %v692 = vmax.f32 %v660, 0.0
    %v693 = vmax.f32 %v661, 0.0
    %v694 = vmax.f32 %v662, 0.0
    %v695 = vmax.f32 %v663, 0.0
    %v696 = vmax.f32 %v664, 0.0
    %v697 = vmax.f32 %v665, 0.0
    %v698 = vmax.f32 %v666, 0.0
    %v699 = vmax.f32 %v667, 0.0
    %v700 = vmax.f32 %v668, 0.0
    %v701 = vmax.f32 %v669, 0.0
    %v702 = vmax.f32 %v670, 0.0
    %v703 = vmax.f32 %v671, 0.0
    %v704 = vmax.f32 %v672, 0.0
    %v705 = vmax.f32 %v673, 0.0
    %v706 = vmax.f32 %v674, 0.0
    %v707 = vmax.f32 %v675, 0.0
    %v708 = vmax.f32 %v676, 0.0
    %v709 = vmax.f32 %v677, 0.0
    %v710 = vmax.f32 %v678, 0.0
    %v711 = vmax.f32 %v679, 0.0
    %v712 = vmax.f32 %v680, 0.0
    %v713 = vmax.f32 %v681, 0.0
    %v714 = vmax.f32 %v682, 0.0
    %v715 = vmax.f32 %v683, 0.0
    %v716 = vmax.f32 %v684, 0.0
    %v717 = vmax.f32 %v685, 0.0
    %v718 = vmax.f32 %v686, 0.0
    %v719 = vld [vmem:[%s3] sm:$0x3]
    %v720 = vld [vmem:[%s4] sm:$0x3]
    %722 = vset.pattern.permute.xlu0 0
    %723 = vperm.xlu0 %722, %v720
    %v724 = vpop.permute.xlu0 %723
    %726 = vmatpush.msra.mxu0 %v717
    %727 = vmatpush.msra.mxu0 %v715
    %728 = vmatpush.msra.mxu0 %v713
    %729 = vmatpush.msra.mxu0 %v711
    %730 = vmatpush.msra.mxu0 %v709
    %731 = vmatpush.msra.mxu0 %v707
    %732 = vmatpush.msra.mxu0 %v705
    %733 = vmatpush.msra.mxu0 %v703
    %734 = vmatpush.msra.mxu0 %v701
    %735 = vmatpush.msra.mxu0 %v699
    %736 = vmatpush.msra.mxu0 %v697
    %737 = vmatpush.msra.mxu0 %v695
    %738 = vmatpush.msra.mxu0 %v693
    %739 = vmatpush.msra.mxu0 %v691
    %740 = vmatpush.msra.mxu0 %v689
    %741 = vmatpush.msra.mxu0 %v687
    %742 = vmatmul.f32.gmra.mxu0 %v719
    %v743 = vpop.f32.mrf.mxu0
    %v744 = vadd.f32 %v724, %v743
    %745 = vdwg.mxu0
    %746 = vmatpush.msra.mxu0 %v718
    %747 = vmatpush.msra.mxu0 %v716
    %748 = vmatpush.msra.mxu0 %v714
    %749 = vmatpush.msra.mxu0 %v712
    %750 = vmatpush.msra.mxu0 %v710
    %751 = vmatpush.msra.mxu0 %v708
    %752 = vmatpush.msra.mxu0 %v706
    %753 = vmatpush.msra.mxu0 %v704
    %754 = vmatpush.msra.mxu0 %v702
    %755 = vmatpush.msra.mxu0 %v700
    %756 = vmatpush.msra.mxu0 %v698
    %757 = vmatpush.msra.mxu0 %v696
    %758 = vmatpush.msra.mxu0 %v694
    %759 = vmatpush.msra.mxu0 %v692
    %760 = vmatpush.msra.mxu0 %v690
    %761 = vmatpush.msra.mxu0 %v688
    %762 = vmatmul.f32.gmra.mxu0 %v719
    %v763 = vpop.f32.mrf.mxu0
    %v764 = vadd.f32 %v724, %v763
    %765 = vdwg.mxu0
    %v768 = vrot.slane %v744, 7
    %v769 = vrot.slane %v764, 7
    %v772 = vsub.f32 %v744, %v768
    %v773 = vsub.f32 %v764, %v769
    %v774 = vsub.f32 0.0, %v772
    %v775 = vsub.f32 0.0, %v773
    %v776 = vmul.f32 %v774, 1.442695
    %v777 = vpow.pop %v776
    %v778 = vmul.f32 %v775, 1.442695
    %v779 = vpow.pop %v778
    %v780 = vadd.f32 %v777, 1.0
    %v781 = vadd.f32 %v779, 1.0
    %v782 = vrcp.pop %v780
    %v783 = vmul.f32 %v780, %v782
    %v784 = vsub.f32 1.0, %v783
    %v785 = vmul.f32 %v782, %v784
    %v786 = vadd.f32 %v782, %v785
    %vm787 = vweird.f32 %v780
    %vm788 = vweird.f32 %v782
    %vm789 = vmor %vm787, %vm788
    %v790 = vsel %vm789, %v782, %v786
    %v791 = vand.u32 2147483647, %v780
    %vm792 = vcmp.eq.f32.partialorder %v791, 8.507059e+37
    %v793 = vand.u32 %v780, 2147483648
    %v794 = vor.u32 1.1754944e-38, %v793
    %v795 = vsel %vm792, %v794, %v790
    %v796 = vmul.f32 1.0, %v795
    %v797 = vrcp.pop %v781
    %v798 = vmul.f32 %v781, %v797
    %v799 = vsub.f32 1.0, %v798
    %v800 = vmul.f32 %v797, %v799
    %v801 = vadd.f32 %v797, %v800
    %vm802 = vweird.f32 %v781
    %vm803 = vweird.f32 %v797
    %vm804 = vmor %vm802, %vm803
    %v805 = vsel %vm804, %v797, %v801
    %v806 = vand.u32 2147483647, %v781
    %vm807 = vcmp.eq.f32.partialorder %v806, 8.507059e+37
    %v808 = vand.u32 %v781, 2147483648
    %v809 = vor.u32 1.1754944e-38, %v808
    %v810 = vsel %vm807, %v809, %v805
    %v811 = vmul.f32 1.0, %v810
    %v812 = vsub.f32 1.0, %v796
    %v813 = vsub.f32 1.0, %v811
    %v816 = vrot.slane %v812, 1
    %v817 = vrot.slane %v813, 1
    %vm820 = vcmask 1040384
    %v821 = vsel %vm820, %v816, %v796
    %v822 = vsel %vm820, %v817, %v811
    %v825 = vrot.slane %v822, 6
    %vm826 = vcmask 1041408
    %v827 = vsel %vm826, %v821, %v825
    %829 = vst [vmem:[#allocation2] sm:$0xf] %v827
    // Predicated region
    $region22: #{policy_forward.1} parent=1 // pred_check
      _
    $region23: #{policy_forward.1} parent=1 // pred_check_branch
      %831 = sbr.rel (0) target = $region25
    $region24: #{policy_forward.1} parent=1 // pred_region
      %833 = vsyncadd [#allocation3], 0
      %s835 = sshll.u32 [#allocation2], 4
      %s836 = int_to_ptr.vmem [resolvable:$true] %s835
      %s837 = sshll.u32 %s5, 4
      %s838 = int_to_ptr.hbm [resolvable:$true] %s837
      %840 = dma.vmem_to_hbm [thread:$0]  %s836, 64, %s838, [#allocation3]
    $region25: #{policy_forward.1} parent=1 // pred_fallthru
      _
    // Predicated region
    $region26: #{policy_forward.1} parent=1 // pred_check
      _
    $region27: #{policy_forward.1} parent=1 // pred_check_branch
      %842 = sbr.rel (0) target = $region29
    $region28: #{policy_forward.1} parent=1 // pred_region
      %844 = dma.done [#allocation3], 64
    $region29: #{policy_forward.1} parent=1 // pred_fallthru
      _
    %845 = vsyncpa [#allocation3], 1

</llo_original>
